<compile_context>
chip_gen: v7x
topology: tpu7x:2x2x1
jax: 0.10.0
libtpu: 0.0.40
codegen_flags: <defaults>
</compile_context>

<pallas_src>
import jax
import jax.numpy as jnp
from jax.experimental import pallas as pl
from jax.experimental.pallas import tpu as pltpu

_LANE = 128
_SUBLANE = 8
_BLOCK_BUDGET = 4 * 1024 * 1024     # target bytes per input/output VMEM block
_VMEM_LIMIT = 32 * 1024 * 1024      # explicit scoped-VMEM limit (v5e default is 16 MiB)
_MAX_IMGS_PER_STEP = 32


def _cdiv(a, b):
    return -(-a // b)


def _round_up(a, b):
    return _cdiv(a, b) * b


def _transpose_tile_kernel(x_ref, o_ref):
    # x_ref: (B, T, Tc) VMEM tile, o_ref: (B, Tc, T) VMEM tile.
    # Batched minor-dims transpose (XLU vxpose per image).  NOTE: .T on a 3-D
    # tile would reverse ALL axes and silently be wrong -- use swapaxes.
    o_ref[...] = jnp.swapaxes(x_ref[...], -1, -2)


def _pick_tiles(n, hw, c, itemsize):
    """Choose (B images/step, T hw-tile, Tc channel-tile) within a VMEM budget."""
    budget = _BLOCK_BUDGET
    min_t = max(512 // itemsize, _LANE)          # output rows >= 512 B

    # --- HW tiling domain ---------------------------------------------------
    if hw >= _LANE:
        t_unit = _LANE                            # T is a multiple of 128 (cdiv tail masked)
        t_max = (hw // _LANE) * _LANE
    else:
        t_unit = hw                               # full-extent block only
        t_max = hw

    # Smallest T we would use (for deciding whether C needs tiling).
    min_t_b = min(t_max, max(min_t, t_unit))

    # --- channel tile ---------------------------------------------------------
    need_in = _round_up(min_t_b, _SUBLANE) * _round_up(c, _LANE) * itemsize
    need_out = _round_up(c, _SUBLANE) * _round_up(min_t_b, _LANE) * itemsize
    if c > _LANE and max(need_in, need_out) > budget:
        tc = budget // (_round_up(min_t_b, _LANE) * itemsize)
        tc = max(_LANE, (tc // _LANE) * _LANE)
        tc = min(tc, (c // _LANE) * _LANE)
    else:
        tc = c                                    # channels untiled (full extent)

    lane_tc = _round_up(tc, _LANE)                # lanes occupied by the input block

    # --- HW tile --------------------------------------------------------------
    if t_unit == hw:
        t = hw
    else:
        t = (budget // (lane_tc * itemsize)) // t_unit * t_unit
        t = max(t_unit, min(t, t_max))
        t = max(t, min(min_t, t_max))             # >= 512 B output rows when possible

    # --- images per grid step (amortize per-step overhead for small C) -------
    per_img_in = _round_up(t, _SUBLANE) * lane_tc * itemsize
    per_img_out = _round_up(tc, _SUBLANE) * _round_up(t, _LANE) * itemsize
    per_img = max(per_img_in, per_img_out, 1)
    b = max(1, min(n, budget // per_img, _MAX_IMGS_PER_STEP))

    # --- megacore: v7x has 2 TensorCores; never emit a 1-step grid ------------
    def steps(b_, t_):
        return _cdiv(n, b_) * _cdiv(hw, t_) * _cdiv(c, tc)

    for _ in range(2):
        if steps(b, t) >= 2:
            break
        if hw >= 2 * _LANE and t >= 2 * _LANE:
            t = max(_LANE, _round_up(t // 2, _LANE))   # halve HW tile, keep 128-multiple
        elif b >= 2:
            b = _cdiv(b, 2)                            # split the image batch
        else:
            break                                      # single tiny block; nothing to split

    return b, t, tc


def to_channels_first(x):
    """x: (N, H, W, C) -> (N, C, H, W), same dtype (== x.permute(0, 3, 1, 2))."""
    n, h, w, c = x.shape
    hw = h * w
    if n == 0 or hw == 0 or c == 0:
        return jnp.transpose(x, (0, 3, 1, 2))

    itemsize = jnp.dtype(x.dtype).itemsize
    x2 = x.reshape(n, hw, c)                      # free row-major reshape

    b, t, tc = _pick_tiles(n, hw, c, itemsize)
    grid = (_cdiv(n, b), _cdiv(hw, t), _cdiv(c, tc))

    # TODO(synk): for C*itemsize < 512 B, add a lane-dense input repack
    # ((N, HW/k, k*C) view + in-kernel de-interleave) to reach HBM roofline.
    out2 = pl.pallas_call(
        _transpose_tile_kernel,
        out_shape=jax.ShapeDtypeStruct((n, c, hw), x.dtype),
        grid_spec=pltpu.PrefetchScalarGridSpec(
            num_scalar_prefetch=0,
            grid=grid,
            in_specs=[
                # (B, T, Tc) slab; last two dims are multiples of (8, 128) or
                # full extents; ragged tails handled by the cdiv grid masking.
                pl.BlockSpec((b, t, tc), lambda ni, ti, ci: (ni, ti, ci)),
            ],
            # Lane-dense output tile: last dim T is a multiple of 128 (or the
            # full HW extent) -> unmasked full-width stores.
            out_specs=pl.BlockSpec((b, tc, t), lambda ni, ti, ci: (ni, ci, ti)),
        ),
        compiler_params=pltpu.CompilerParams(
            dimension_semantics=("parallel", "parallel", "parallel"),
            vmem_limit_bytes=_VMEM_LIMIT,
        ),
        cost_estimate=pl.CostEstimate(
            flops=0,
            transcendentals=0,
            bytes_accessed=2 * n * hw * c * itemsize,
        ),
    )(x2)

    # Free row-major reshape: (N, C, HW) -> (N, C, H, W).
    return out2.reshape(n, c, h, w)


def _check(x):
    y = jax.block_until_ready(to_channels_first(x))
    ref = jnp.transpose(x, (0, 3, 1, 2))
    assert y.shape == ref.shape, (y.shape, ref.shape)
    assert y.dtype == x.dtype, (y.dtype, x.dtype)
    assert jnp.array_equal(y, ref), "mismatch vs reference permute"


if __name__ == "__main__":
    key = jax.random.PRNGKey(0)
    keys = jax.random.split(key, 6)

    # Primary small shape consistent with the module (NHWC input).
    _check(jax.random.normal(keys[0], (2, 16, 16, 4), dtype=jnp.float32))

    # Multi-tile HW path (HW = 4096).
    _check(jax.random.normal(keys[1], (2, 64, 64, 8), dtype=jnp.float32))

    # Ragged HW path (HW = 260, not a multiple of 128 -> masked tail block).
    _check(jax.random.normal(keys[2], (1, 20, 13, 4), dtype=jnp.float32))

    # bf16 path (sublane packing).
    _check(jax.random.normal(keys[3], (2, 16, 32, 16), dtype=jnp.bfloat16))

    # Small-C batching path: several tiny images per grid step + ragged N.
    _check(jax.random.normal(keys[4], (3, 8, 8, 4), dtype=jnp.float32))

    # Large-C / small-HW path: channel tiling kicks in.
    _check(jax.random.normal(keys[5], (1, 4, 4, 16384), dtype=jnp.float32))

    print("KERNEL_OK")
</pallas_src>

<mosaic_0001>
module attributes {stable_mosaic.version = 11 : i64} {
  func.func @_transpose_tile_kernel(%arg0: i32, %arg1: i32, %arg2: i32, %arg3: memref<2x128x4xf32, #tpu.memory_space<vmem>>, %arg4: memref<2x4x128xf32, #tpu.memory_space<vmem>>) attributes {dimension_semantics = [#tpu.dimension_semantics<parallel>, #tpu.dimension_semantics<parallel>, #tpu.dimension_semantics<parallel>], iteration_bounds = array<i64: 1, 2, 1>, scalar_prefetch = 0 : i64, scratch_operands = 0 : i64, tpu.core_type = #tpu.core_type<tc>, window_params = [{transform_indices = @transform_0, window_bounds = array<i64: 2, 128, 4>}, {transform_indices = @transform_1, window_bounds = array<i64: 2, 4, 128>}]} {
    %c0 = arith.constant 0 : index
    %c0_0 = arith.constant 0 : index
    %c0_1 = arith.constant 0 : index
    %0 = vector.load %arg3[%c0, %c0_0, %c0_1] : memref<2x128x4xf32, #tpu.memory_space<vmem>>, vector<2x128x4xf32>
    %1 = tpu.transpose %0, [0, 2, 1] : vector<2x128x4xf32> -> vector<2x4x128xf32>
    %c0_2 = arith.constant 0 : index
    %c0_3 = arith.constant 0 : index
    %c0_4 = arith.constant 0 : index
    %2 = vector.load %arg4[%c0_2, %c0_3, %c0_4] : memref<2x4x128xf32, #tpu.memory_space<vmem>>, vector<2x4x128xf32>
    tpu.vector_store %arg4[%c0_2, %c0_3, %c0_4], %1 {strides = array<i32>} : memref<2x4x128xf32, #tpu.memory_space<vmem>>, vector<2x4x128xf32>,
    return
  }
  func.func @transform_0(%arg0: i32, %arg1: i32, %arg2: i32) -> (i32, i32, i32) {
    %c0_i32 = arith.constant 0 : i32
    return %arg0, %arg1, %arg2 : i32, i32, i32
  }
  func.func @transform_1(%arg0: i32, %arg1: i32, %arg2: i32) -> (i32, i32, i32) {
    %c0_i32 = arith.constant 0 : i32
    return %arg0, %arg2, %arg1 : i32, i32, i32
  }
}

</mosaic_0001>

<llo_original>
// kernel: tpu_custom_call.1
$region0: #{tpu_custom_call.1}
  #allocation0 [shape = 'u32[]', space=smem, size = 0x4, offset = 0x4, fixed_abs, tag = 'smem constant byte address 0x4 - core index']
  #allocation1 [shape = 'u32[144,128]{1,0:T(1,128)}', space=vmem, size = 0x12000, scoped, tag = 'internal scratch']
  %s0 = inlined_call_operand.vmem [shape: f32[2,256,4], index: 0, kind: input, shape index: {}]
  %s1 = inlined_call_operand.hbm [shape: f32[2,4,256], index: 1, kind: output, shape index: {}]
  %s2 = sld [smem:[#allocation0]]
  $region75: #{tpu_custom_call.1} parent=0
    _
  %s4 = ssub.s32 1, %s2
  %s5 = scalar_select 0, %s4, %s2
  $region1: #{tpu_custom_call.1} parent=0
    #allocation2 [shape = 'u8[262144]{0}', space=vmem, size = 0x40000, scoped, tag = 'input window, operand 0']
    #allocation3 [shape = 'u8[8192]{0}', space=vmem, size = 0x2000, scoped, tag = 'output window, operand 0']
    #allocation4 [shape = 's32[2]{0}', space=sflag, size = 0x8, scoped, tag = 'scoped memory for tpu_custom_call.1']
    %6 = vsyncpa [#allocation4], 0
    %s7 = scalar_lea.sflag [#allocation4], 1
    %8 = vsyncpa %s7, 0
    loop: start=0, step=1, limit=4
    $region2: #{tpu_custom_call.1} parent=1 // loop_pre_header
      _
    $region3: #{tpu_custom_call.1} parent=1 // loop_header
      %s10 = sphi 0, %s14
      %p11 = scmp.ge.s32.totalorder %s10, 4
      %s17 = sphi 0, %s36
      %s18 = sphi 0, %s32
      %s19 = sphi 0, %s28
      %s20 = sphi 0, %s17
      %s21 = sphi 0, %s18
      %s22 = sphi 0, %s19
      %s23 = sphi 0, %s20
      %s24 = sphi 0, %s21
      %s25 = sphi 0, %s22
      %s43 = sphi 0, %s45
      %s46 = sphi 0, %s43
      %s47 = sphi 0, %s46
      %s63 = sphi 0, %s47
      %s73 = sphi 0, %s75
      %s76 = sphi 0, %s73
      %s77 = sphi 0, %s76
      %s93 = sphi 0, %s77
    $region4: #{tpu_custom_call.1} parent=1 // loop_header_branch
      %13 = sbr.rel (%p11) target = $region8
    $region5: #{tpu_custom_call.1} parent=1 // loop_body
      %s15 = ssub.s32 %s10, 1
      %s16 = ssub.s32 %s10, 2
      %s26 = sadd.s32 1, %s19
      %p27 = scmp.ge.s32.totalorder %s26, 1
      %s28 = scalar_select %p27, 0, %s26
      %s29 = sadd.s32 1, %s18
      %s30 = scalar_select %p27, %s29, %s18
      %p31 = scmp.ge.s32.totalorder %s30, 2
      %s32 = scalar_select %p31, 0, %s30
      %s33 = sadd.s32 1, %s17
      %s34 = scalar_select %p31, %s33, %s17
      %p35 = scmp.ge.s32.totalorder %s34, 1
      %s36 = scalar_select %p35, 0, %s34
      %s37 = ssub.s32 %s17, %s36
      %s38 = ssub.s32 %s18, %s32
      %s39 = sor.u32 %s37, %s38
      %s40 = ssub.s32 %s19, %s28
      %s41 = sor.u32 %s39, %s40
      %p42 = scmp.eq.s32.totalorder %s41, 0
      %s44 = sadd.s32 %s43, 1
      %s45 = scalar_select %p42, %s43, %s44
      %p48 = pneg %p42
      %p49 = scmp.eq.s32.totalorder %s10, 1
      %p50 = por %p48, %p49
      %p51 = scmp.ne.s32.totalorder %s43, %s46
      %p52 = scmp.eq.s32.totalorder %s10, 0
      %p53 = por %p51, %p52
      %p54 = scmp.ne.s32.totalorder %s43, %s46
      %p55 = scmp.eq.s32.totalorder %s15, 1
      %p56 = por %p54, %p55
      %p57 = scmp.ne.s32.totalorder %s46, %s47
      %p58 = scmp.eq.s32.totalorder %s15, 0
      %p59 = por %p57, %p58
      %p60 = scmp.ne.s32.totalorder %s46, %s47
      %p61 = scmp.eq.s32.totalorder %s16, 1
      %p62 = por %p60, %p61
      %p64 = scmp.ne.s32.totalorder %s47, %s63
      %p65 = scmp.eq.s32.totalorder %s16, 0
      %p66 = por %p64, %p65
      %s67 = ssub.s32 %s17, %s36
      %s68 = ssub.s32 %s19, %s28
      %s69 = sor.u32 %s67, %s68
      %s70 = ssub.s32 %s18, %s32
      %s71 = sor.u32 %s69, %s70
      %p72 = scmp.eq.s32.totalorder %s71, 0
      %s74 = sadd.s32 %s73, 1
      %s75 = scalar_select %p72, %s73, %s74
      %p78 = pneg %p72
      %p79 = scmp.eq.s32.totalorder %s10, 1
      %p80 = por %p78, %p79
      %p81 = scmp.ne.s32.totalorder %s73, %s76
      %p82 = scmp.eq.s32.totalorder %s10, 0
      %p83 = por %p81, %p82
      %p84 = scmp.ne.s32.totalorder %s73, %s76
      %p85 = scmp.eq.s32.totalorder %s15, 1
      %p86 = por %p84, %p85
      %p87 = scmp.ne.s32.totalorder %s76, %s77
      %p88 = scmp.eq.s32.totalorder %s15, 0
      %p89 = por %p87, %p88
      %p90 = scmp.ne.s32.totalorder %s76, %s77
      %p91 = scmp.eq.s32.totalorder %s16, 1
      %p92 = por %p90, %p91
      %p94 = scmp.ne.s32.totalorder %s77, %s93
      %p95 = scmp.eq.s32.totalorder %s16, 0
      %p96 = por %p94, %p95
      %p97 = scmp.le.s32.totalorder 1, %s10
      %p98 = scmp.lt.s32.totalorder %s10, 3
      %p99 = pnand %p97, %p98
      %p100 = pneg %p99
      // Predicated region
      $region9: #{tpu_custom_call.1} parent=5 // pred_check
        _
      $region10: #{tpu_custom_call.1} parent=5 // pred_check_branch
        %102 = sbr.rel (%p99) target = $region12
      $region11: #{tpu_custom_call.1} parent=5 // pred_region
        %s103 = ssub.s32 %s10, 1
      $region12: #{tpu_custom_call.1} parent=5 // pred_fallthru
        _
      %p104 = scmp.lt.s32.totalorder %s10, 2
      // Predicated region
      $region13: #{tpu_custom_call.1} parent=5 // pred_check
        %p105 = pneg %p104
      $region14: #{tpu_custom_call.1} parent=5 // pred_check_branch
        %107 = sbr.rel (%p105) target = $region16
      $region15: #{tpu_custom_call.1} parent=5 // pred_region
        // Predicated region
        $region17: #{tpu_custom_call.1} parent=15 // pred_check
          %p108 = pneg %p53
        $region18: #{tpu_custom_call.1} parent=15 // pred_check_branch
          %110 = sbr.rel (%p108) target = $region20
        $region19: #{tpu_custom_call.1} parent=15 // pred_region
          %s111 = sand.u32 %s43, 1
          %s112 = sand.u32 %s43, 1
          %s113 = smul.addr %s112, 256
          %s114 = scalar_lea.vmem [#allocation2], %s113
          %s115 = smul.u32 2, %s17
          %s116 = smul.u32 16, %s18
          %s117 = sadd.s32 %s19, %s116
          %s118 = smul.addr %s115, 32
          %s119 = sadd.s32 %s117, %s118
          %s120 = smul.addr %s119, 8
          %s121 = scalar_lea.vmem %s0, %s120
          // Predicated region
          $region21: #{tpu_custom_call.1} parent=19 // pred_check
            _
          $region22: #{tpu_custom_call.1} parent=19 // pred_check_branch
            %123 = sbr.rel (0) target = $region24
          $region23: #{tpu_custom_call.1} parent=19 // pred_region
            // Predicated region
            $region25: #{tpu_custom_call.1} parent=23 // pred_check
              _
            $region26: #{tpu_custom_call.1} parent=23 // pred_check_branch
              %125 = sbr.rel (0) target = $region28
            $region27: #{tpu_custom_call.1} parent=23 // pred_region
              // Predicated region
              $region40: #{tpu_custom_call.1} parent=27 // pred_check
                _
              $region41: #{tpu_custom_call.1} parent=27 // pred_check_branch
                %202 = sbr.rel (0) target = $region43
              $region42: #{tpu_custom_call.1} parent=27 // pred_region
                loop: start=0, step=1, limit=1
                $region44: #{tpu_custom_call.1} parent=42 // loop_pre_header
                  _
                $region45: #{tpu_custom_call.1} parent=42 // loop_header
                  %s204 = sphi 0, %s208
                  %p205 = scmp.ge.s32.totalorder %s204, 1
                  %s209 = sphi %s121, %s121
                  %s210 = sphi %s114, %s114
                $region46: #{tpu_custom_call.1} parent=42 // loop_header_branch
                  %207 = sbr.rel (%p205) target = $region50
                $region47: #{tpu_custom_call.1} parent=42 // loop_body
                  %v211 = vld [vmem:[%s209] sm:$0xff]
                  %212 = vst [vmem:[%s210] sm:$0xff] %v211
                  %v213 = vld [vmem:[%s209 + $0x8] sm:$0xff]
                  %214 = vst [vmem:[%s210 + $0x8] sm:$0xff] %v213
                  %v215 = vld [vmem:[%s209 + $0x10] sm:$0xff]
                  %216 = vst [vmem:[%s210 + $0x10] sm:$0xff] %v215
                  %v217 = vld [vmem:[%s209 + $0x18] sm:$0xff]
                  %218 = vst [vmem:[%s210 + $0x18] sm:$0xff] %v217
                  %v219 = vld [vmem:[%s209 + $0x20] sm:$0xff]
                  %220 = vst [vmem:[%s210 + $0x20] sm:$0xff] %v219
                  %v221 = vld [vmem:[%s209 + $0x28] sm:$0xff]
                  %222 = vst [vmem:[%s210 + $0x28] sm:$0xff] %v221
                  %v223 = vld [vmem:[%s209 + $0x30] sm:$0xff]
                  %224 = vst [vmem:[%s210 + $0x30] sm:$0xff] %v223
                  %v225 = vld [vmem:[%s209 + $0x38] sm:$0xff]
                  %226 = vst [vmem:[%s210 + $0x38] sm:$0xff] %v225
                  %v227 = vld [vmem:[%s209 + $0x40] sm:$0xff]
                  %228 = vst [vmem:[%s210 + $0x40] sm:$0xff] %v227
                  %v229 = vld [vmem:[%s209 + $0x48] sm:$0xff]
                  %230 = vst [vmem:[%s210 + $0x48] sm:$0xff] %v229
                  %v231 = vld [vmem:[%s209 + $0x50] sm:$0xff]
                  %232 = vst [vmem:[%s210 + $0x50] sm:$0xff] %v231
                  %v233 = vld [vmem:[%s209 + $0x58] sm:$0xff]
                  %234 = vst [vmem:[%s210 + $0x58] sm:$0xff] %v233
                  %v235 = vld [vmem:[%s209 + $0x60] sm:$0xff]
                  %236 = vst [vmem:[%s210 + $0x60] sm:$0xff] %v235
                  %v237 = vld [vmem:[%s209 + $0x68] sm:$0xff]
                  %238 = vst [vmem:[%s210 + $0x68] sm:$0xff] %v237
                  %v239 = vld [vmem:[%s209 + $0x70] sm:$0xff]
                  %240 = vst [vmem:[%s210 + $0x70] sm:$0xff] %v239
                  %v241 = vld [vmem:[%s209 + $0x78] sm:$0xff]
                  %242 = vst [vmem:[%s210 + $0x78] sm:$0xff] %v241
                  %v243 = vld [vmem:[%s209 + $0x100] sm:$0xff]
                  %244 = vst [vmem:[%s210 + $0x80] sm:$0xff] %v243
                  %v245 = vld [vmem:[%s209 + $0x108] sm:$0xff]
                  %246 = vst [vmem:[%s210 + $0x88] sm:$0xff] %v245
                  %v247 = vld [vmem:[%s209 + $0x110] sm:$0xff]
                  %248 = vst [vmem:[%s210 + $0x90] sm:$0xff] %v247
                  %v249 = vld [vmem:[%s209 + $0x118] sm:$0xff]
                  %250 = vst [vmem:[%s210 + $0x98] sm:$0xff] %v249
                  %v251 = vld [vmem:[%s209 + $0x120] sm:$0xff]
                  %252 = vst [vmem:[%s210 + $0xa0] sm:$0xff] %v251
                  %v253 = vld [vmem:[%s209 + $0x128] sm:$0xff]
                  %254 = vst [vmem:[%s210 + $0xa8] sm:$0xff] %v253
                  %v255 = vld [vmem:[%s209 + $0x130] sm:$0xff]
                  %256 = vst [vmem:[%s210 + $0xb0] sm:$0xff] %v255
                  %v257 = vld [vmem:[%s209 + $0x138] sm:$0xff]
                  %258 = vst [vmem:[%s210 + $0xb8] sm:$0xff] %v257
                  %v259 = vld [vmem:[%s209 + $0x140] sm:$0xff]
                  %260 = vst [vmem:[%s210 + $0xc0] sm:$0xff] %v259
                  %v261 = vld [vmem:[%s209 + $0x148] sm:$0xff]
                  %262 = vst [vmem:[%s210 + $0xc8] sm:$0xff] %v261
                  %v263 = vld [vmem:[%s209 + $0x150] sm:$0xff]
                  %264 = vst [vmem:[%s210 + $0xd0] sm:$0xff] %v263
                  %v265 = vld [vmem:[%s209 + $0x158] sm:$0xff]
                  %266 = vst [vmem:[%s210 + $0xd8] sm:$0xff] %v265
                  %v267 = vld [vmem:[%s209 + $0x160] sm:$0xff]
                  %268 = vst [vmem:[%s210 + $0xe0] sm:$0xff] %v267
                  %v269 = vld [vmem:[%s209 + $0x168] sm:$0xff]
                  %270 = vst [vmem:[%s210 + $0xe8] sm:$0xff] %v269
                  %v271 = vld [vmem:[%s209 + $0x170] sm:$0xff]
                  %272 = vst [vmem:[%s210 + $0xf0] sm:$0xff] %v271
                  %v273 = vld [vmem:[%s209 + $0x178] sm:$0xff]
                  %274 = vst [vmem:[%s210 + $0xf8] sm:$0xff] %v273
                $region48: #{tpu_custom_call.1} parent=42 // loop_footer
                  %s208 = sadd.s32 1, %s204
                $region49: #{tpu_custom_call.1} parent=42 // loop_footer_branch
                  %203 = sbr.rel target = $region45
                $region50: #{tpu_custom_call.1} parent=42 // loop_exit
                  _
              $region43: #{tpu_custom_call.1} parent=27 // pred_fallthru
                _
              // Predicated region
              $region51: #{tpu_custom_call.1} parent=27 // pred_check
                _
              $region52: #{tpu_custom_call.1} parent=27 // pred_check_branch
                %276 = sbr.rel target = $region54
              $region53: #{tpu_custom_call.1} parent=27 // pred_region
                _
              $region54: #{tpu_custom_call.1} parent=27 // pred_fallthru
                _
            $region28: #{tpu_custom_call.1} parent=23 // pred_fallthru
              _
            // Predicated region
            $region29: #{tpu_custom_call.1} parent=23 // pred_check
              _
            $region30: #{tpu_custom_call.1} parent=23 // pred_check_branch
              %127 = sbr.rel target = $region32
            $region31: #{tpu_custom_call.1} parent=23 // pred_region
              loop: start=0, step=1, limit=1
              $region33: #{tpu_custom_call.1} parent=31 // loop_pre_header
                _
              $region34: #{tpu_custom_call.1} parent=31 // loop_header
                %s130 = sphi 0, %s134
                %p131 = scmp.ge.s32.totalorder %s130, 1
                %s135 = sphi %s121, %s121
                %s136 = sphi %s114, %s114
              $region35: #{tpu_custom_call.1} parent=31 // loop_header_branch
                %133 = sbr.rel (%p131) target = $region39
              $region36: #{tpu_custom_call.1} parent=31 // loop_body
                %v137 = vld [vmem:[%s135] sm:$0xff]
                %138 = vst [vmem:[%s136] sm:$0xff] %v137
                %v139 = vld [vmem:[%s135 + $0x8] sm:$0xff]
                %140 = vst [vmem:[%s136 + $0x8] sm:$0xff] %v139
                %v141 = vld [vmem:[%s135 + $0x10] sm:$0xff]
                %142 = vst [vmem:[%s136 + $0x10] sm:$0xff] %v141
                %v143 = vld [vmem:[%s135 + $0x18] sm:$0xff]
                %144 = vst [vmem:[%s136 + $0x18] sm:$0xff] %v143
                %v145 = vld [vmem:[%s135 + $0x20] sm:$0xff]
                %146 = vst [vmem:[%s136 + $0x20] sm:$0xff] %v145
                %v147 = vld [vmem:[%s135 + $0x28] sm:$0xff]
                %148 = vst [vmem:[%s136 + $0x28] sm:$0xff] %v147
                %v149 = vld [vmem:[%s135 + $0x30] sm:$0xff]
                %150 = vst [vmem:[%s136 + $0x30] sm:$0xff] %v149
                %v151 = vld [vmem:[%s135 + $0x38] sm:$0xff]
                %152 = vst [vmem:[%s136 + $0x38] sm:$0xff] %v151
                %v153 = vld [vmem:[%s135 + $0x40] sm:$0xff]
                %154 = vst [vmem:[%s136 + $0x40] sm:$0xff] %v153
                %v155 = vld [vmem:[%s135 + $0x48] sm:$0xff]
                %156 = vst [vmem:[%s136 + $0x48] sm:$0xff] %v155
                %v157 = vld [vmem:[%s135 + $0x50] sm:$0xff]
                %158 = vst [vmem:[%s136 + $0x50] sm:$0xff] %v157
                %v159 = vld [vmem:[%s135 + $0x58] sm:$0xff]
                %160 = vst [vmem:[%s136 + $0x58] sm:$0xff] %v159
                %v161 = vld [vmem:[%s135 + $0x60] sm:$0xff]
                %162 = vst [vmem:[%s136 + $0x60] sm:$0xff] %v161
                %v163 = vld [vmem:[%s135 + $0x68] sm:$0xff]
                %164 = vst [vmem:[%s136 + $0x68] sm:$0xff] %v163
                %v165 = vld [vmem:[%s135 + $0x70] sm:$0xff]
                %166 = vst [vmem:[%s136 + $0x70] sm:$0xff] %v165
                %v167 = vld [vmem:[%s135 + $0x78] sm:$0xff]
                %168 = vst [vmem:[%s136 + $0x78] sm:$0xff] %v167
                %v169 = vld [vmem:[%s135 + $0x100] sm:$0xff]
                %170 = vst [vmem:[%s136 + $0x80] sm:$0xff] %v169
                %v171 = vld [vmem:[%s135 + $0x108] sm:$0xff]
                %172 = vst [vmem:[%s136 + $0x88] sm:$0xff] %v171
                %v173 = vld [vmem:[%s135 + $0x110] sm:$0xff]
                %174 = vst [vmem:[%s136 + $0x90] sm:$0xff] %v173
                %v175 = vld [vmem:[%s135 + $0x118] sm:$0xff]
                %176 = vst [vmem:[%s136 + $0x98] sm:$0xff] %v175
                %v177 = vld [vmem:[%s135 + $0x120] sm:$0xff]
                %178 = vst [vmem:[%s136 + $0xa0] sm:$0xff] %v177
                %v179 = vld [vmem:[%s135 + $0x128] sm:$0xff]
                %180 = vst [vmem:[%s136 + $0xa8] sm:$0xff] %v179
                %v181 = vld [vmem:[%s135 + $0x130] sm:$0xff]
                %182 = vst [vmem:[%s136 + $0xb0] sm:$0xff] %v181
                %v183 = vld [vmem:[%s135 + $0x138] sm:$0xff]
                %184 = vst [vmem:[%s136 + $0xb8] sm:$0xff] %v183
                %v185 = vld [vmem:[%s135 + $0x140] sm:$0xff]
                %186 = vst [vmem:[%s136 + $0xc0] sm:$0xff] %v185
                %v187 = vld [vmem:[%s135 + $0x148] sm:$0xff]
                %188 = vst [vmem:[%s136 + $0xc8] sm:$0xff] %v187
                %v189 = vld [vmem:[%s135 + $0x150] sm:$0xff]
                %190 = vst [vmem:[%s136 + $0xd0] sm:$0xff] %v189
                %v191 = vld [vmem:[%s135 + $0x158] sm:$0xff]
                %192 = vst [vmem:[%s136 + $0xd8] sm:$0xff] %v191
                %v193 = vld [vmem:[%s135 + $0x160] sm:$0xff]
                %194 = vst [vmem:[%s136 + $0xe0] sm:$0xff] %v193
                %v195 = vld [vmem:[%s135 + $0x168] sm:$0xff]
                %196 = vst [vmem:[%s136 + $0xe8] sm:$0xff] %v195
                %v197 = vld [vmem:[%s135 + $0x170] sm:$0xff]
                %198 = vst [vmem:[%s136 + $0xf0] sm:$0xff] %v197
                %v199 = vld [vmem:[%s135 + $0x178] sm:$0xff]
                %200 = vst [vmem:[%s136 + $0xf8] sm:$0xff] %v199
              $region37: #{tpu_custom_call.1} parent=31 // loop_footer
                %s134 = sadd.s32 1, %s130
              $region38: #{tpu_custom_call.1} parent=31 // loop_footer_branch
                %129 = sbr.rel target = $region34
              $region39: #{tpu_custom_call.1} parent=31 // loop_exit
                _
            $region32: #{tpu_custom_call.1} parent=23 // pred_fallthru
              _
          $region24: #{tpu_custom_call.1} parent=19 // pred_fallthru
            _
          %277 = vnop
        $region20: #{tpu_custom_call.1} parent=15 // pred_fallthru
          _
      $region16: #{tpu_custom_call.1} parent=5 // pred_fallthru
        _
      %p278 = scmp.le.s32.totalorder 1, %s10
      %p279 = scmp.lt.s32.totalorder %s10, 3
      %p280 = pnand %p278, %p279
      %p281 = pneg %p280
      // Predicated region
      $region55: #{tpu_custom_call.1} parent=5 // pred_check
        _
      $region56: #{tpu_custom_call.1} parent=5 // pred_check_branch
        %283 = sbr.rel (%p280) target = $region58
      $region57: #{tpu_custom_call.1} parent=5 // pred_region
        %s284 = ssub.s32 %s10, 1
        %s285 = sand.u32 %s46, 1
        %s286 = sand.u32 %s46, 1
        %s287 = smul.addr %s286, 256
        %s288 = scalar_lea.vmem [#allocation2], %s287
        // Predicated region
        $region59: #{tpu_custom_call.1} parent=57 // pred_check
          %p289 = pneg %p59
        $region60: #{tpu_custom_call.1} parent=57 // pred_check_branch
          %291 = sbr.rel (%p289) target = $region62
        $region61: #{tpu_custom_call.1} parent=57 // pred_region
          _
        $region62: #{tpu_custom_call.1} parent=57 // pred_fallthru
          _
        %s292 = sand.u32 %s46, 1
        %s293 = sand.u32 %s46, 1
        %s294 = smul.addr %s293, 256
        %s295 = scalar_lea.vmem [#allocation2], %s294
        %p296 = pneg %p59
        %p297 = pneg %p56
        %p298 = pneg %p89
        %p299 = pneg %p86
        %s300 = sand.u32 %s76, 1
        %s301 = scalar_lea.sflag [#allocation4], %s300
        %s302 = sand.u32 %s76, 1
        %s303 = smul.addr %s302, 8
        %s304 = scalar_lea.vmem [#allocation3], %s303
        %s305 = smul.u32 2, %s20
        %s306 = smul.u32 16, %s21
        %s307 = smul.u32 2, %s20
        %v308 = vld [vmem:[%s288] sm:$0xff]
        %v309 = vld [vmem:[%s288 + $0x8] sm:$0xff]
        %v310 = vld [vmem:[%s288 + $0x10] sm:$0xff]
        %v311 = vld [vmem:[%s288 + $0x18] sm:$0xff]
        %v312 = vld [vmem:[%s288 + $0x20] sm:$0xff]
        %v313 = vld [vmem:[%s288 + $0x28] sm:$0xff]
        %v314 = vld [vmem:[%s288 + $0x30] sm:$0xff]
        %v315 = vld [vmem:[%s288 + $0x38] sm:$0xff]
        %v316 = vld [vmem:[%s288 + $0x40] sm:$0xff]
        %v317 = vld [vmem:[%s288 + $0x48] sm:$0xff]
        %v318 = vld [vmem:[%s288 + $0x50] sm:$0xff]
        %v319 = vld [vmem:[%s288 + $0x58] sm:$0xff]
        %v320 = vld [vmem:[%s288 + $0x60] sm:$0xff]
        %v321 = vld [vmem:[%s288 + $0x68] sm:$0xff]
        %v322 = vld [vmem:[%s288 + $0x70] sm:$0xff]
        %v323 = vld [vmem:[%s288 + $0x78] sm:$0xff]
        %v324 = vld [vmem:[%s288 + $0x80] sm:$0xff]
        %v325 = vld [vmem:[%s288 + $0x88] sm:$0xff]
        %v326 = vld [vmem:[%s288 + $0x90] sm:$0xff]
        %v327 = vld [vmem:[%s288 + $0x98] sm:$0xff]
        %v328 = vld [vmem:[%s288 + $0xa0] sm:$0xff]
        %v329 = vld [vmem:[%s288 + $0xa8] sm:$0xff]
        %v330 = vld [vmem:[%s288 + $0xb0] sm:$0xff]
        %v331 = vld [vmem:[%s288 + $0xb8] sm:$0xff]
        %v332 = vld [vmem:[%s288 + $0xc0] sm:$0xff]
        %v333 = vld [vmem:[%s288 + $0xc8] sm:$0xff]
        %v334 = vld [vmem:[%s288 + $0xd0] sm:$0xff]
        %v335 = vld [vmem:[%s288 + $0xd8] sm:$0xff]
        %v336 = vld [vmem:[%s288 + $0xe0] sm:$0xff]
        %v337 = vld [vmem:[%s288 + $0xe8] sm:$0xff]
        %v338 = vld [vmem:[%s288 + $0xf0] sm:$0xff]
        %v339 = vld [vmem:[%s288 + $0xf8] sm:$0xff]
        %340 = vxpose.xlu0.b32.start [1/16] %v308, 128
        %341 = vxpose.xlu0.b32.cont [2/16] %v309, 128
        %342 = vxpose.xlu0.b32.cont [3/16] %v310, 128
        %343 = vxpose.xlu0.b32.cont [4/16] %v311, 128
        %344 = vxpose.xlu0.b32.cont [5/16] %v312, 128
        %345 = vxpose.xlu0.b32.cont [6/16] %v313, 128
        %346 = vxpose.xlu0.b32.cont [7/16] %v314, 128
        %347 = vxpose.xlu0.b32.cont [8/16] %v315, 128
        %348 = vxpose.xlu0.b32.cont [9/16] %v316, 128
        %349 = vxpose.xlu0.b32.cont [10/16] %v317, 128
        %350 = vxpose.xlu0.b32.cont [11/16] %v318, 128
        %351 = vxpose.xlu0.b32.cont [12/16] %v319, 128
        %352 = vxpose.xlu0.b32.cont [13/16] %v320, 128
        %353 = vxpose.xlu0.b32.cont [14/16] %v321, 128
        %354 = vxpose.xlu0.b32.cont [15/16] %v322, 128
        %355 = vxpose.xlu0.b32.end [16/16] %v323, 128
        %v356 = vpop.trf.xlu0
        %v357 = vpop.trf.xlu0
        %v358 = vpop.trf.xlu0
        %v359 = vpop.trf.xlu0
        %v360 = vpop.trf.xlu0
        %v361 = vpop.trf.xlu0
        %v362 = vpop.trf.xlu0
        %v363 = vpop.trf.xlu0
        %v364 = vpop.trf.xlu0
        %v365 = vpop.trf.xlu0
        %v366 = vpop.trf.xlu0
        %v367 = vpop.trf.xlu0
        %v368 = vpop.trf.xlu0
        %v369 = vpop.trf.xlu0
        %v370 = vpop.trf.xlu0
        %v371 = vpop.trf.xlu0
        %372 = vxpose.xlu0.b32.start [1/16] %v324, 128
        %373 = vxpose.xlu0.b32.cont [2/16] %v325, 128
        %374 = vxpose.xlu0.b32.cont [3/16] %v326, 128
        %375 = vxpose.xlu0.b32.cont [4/16] %v327, 128
        %376 = vxpose.xlu0.b32.cont [5/16] %v328, 128
        %377 = vxpose.xlu0.b32.cont [6/16] %v329, 128
        %378 = vxpose.xlu0.b32.cont [7/16] %v330, 128
        %379 = vxpose.xlu0.b32.cont [8/16] %v331, 128
        %380 = vxpose.xlu0.b32.cont [9/16] %v332, 128
        %381 = vxpose.xlu0.b32.cont [10/16] %v333, 128
        %382 = vxpose.xlu0.b32.cont [11/16] %v334, 128
        %383 = vxpose.xlu0.b32.cont [12/16] %v335, 128
        %384 = vxpose.xlu0.b32.cont [13/16] %v336, 128
        %385 = vxpose.xlu0.b32.cont [14/16] %v337, 128
        %386 = vxpose.xlu0.b32.cont [15/16] %v338, 128
        %387 = vxpose.xlu0.b32.end [16/16] %v339, 128
        %v388 = vpop.trf.xlu0
        %v389 = vpop.trf.xlu0
        %v390 = vpop.trf.xlu0
        %v391 = vpop.trf.xlu0
        %v392 = vpop.trf.xlu0
        %v393 = vpop.trf.xlu0
        %v394 = vpop.trf.xlu0
        %v395 = vpop.trf.xlu0
        %v396 = vpop.trf.xlu0
        %v397 = vpop.trf.xlu0
        %v398 = vpop.trf.xlu0
        %v399 = vpop.trf.xlu0
        %v400 = vpop.trf.xlu0
        %v401 = vpop.trf.xlu0
        %v402 = vpop.trf.xlu0
        %v403 = vpop.trf.xlu0
        %404 = vst [vmem:[%s304] sm:$0xf] %v356
        %405 = vst [vmem:[%s304 + $0x4] sm:$0xf] %v388
        %s406 = sand.u32 %s76, 1
        %s407 = scalar_lea.sflag [#allocation4], %s406
        %s408 = sand.u32 %s76, 1
        %s409 = smul.addr %s408, 8
        %s410 = scalar_lea.vmem [#allocation3], %s409
        // Predicated region
        $region63: #{tpu_custom_call.1} parent=57 // pred_check
          %p411 = pneg %p86
        $region64: #{tpu_custom_call.1} parent=57 // pred_check_branch
          %413 = sbr.rel (%p411) target = $region66
        $region65: #{tpu_custom_call.1} parent=57 // pred_region
          %s414 = smul.u32 2, %s20
          %s416 = ssub.s32 128, 128
          %417 = vsyncadd %s407, %s416
          %s418 = smul.addr %s22, 2
          %s419 = sadd.s32 %s21, %s418
          %s420 = smul.addr %s414, 2
          %s421 = sadd.s32 %s419, %s420
          %s422 = smul.addr %s421, 64
          %s423 = scalar_lea.hbm %s1, %s422
          %s424 = sshll.u32 %s410, 4
          %s425 = int_to_ptr.vmem [resolvable:$true] %s424
          %430 = dma.vmem_to_hbm [thread:$0]  %s425, 128, %s423, %s407, 64, 128, 4
        $region66: #{tpu_custom_call.1} parent=57 // pred_fallthru
          _
      $region58: #{tpu_custom_call.1} parent=5 // pred_fallthru
        _
      %p431 = scmp.le.s32.totalorder 2, %s10
      // Predicated region
      $region67: #{tpu_custom_call.1} parent=5 // pred_check
        %p432 = pneg %p431
      $region68: #{tpu_custom_call.1} parent=5 // pred_check_branch
        %434 = sbr.rel (%p432) target = $region70
      $region69: #{tpu_custom_call.1} parent=5 // pred_region
        %s435 = ssub.s32 %s10, 2
        // Predicated region
        $region71: #{tpu_custom_call.1} parent=69 // pred_check
          %p436 = pneg %p92
        $region72: #{tpu_custom_call.1} parent=69 // pred_check_branch
          %438 = sbr.rel (%p436) target = $region74
        $region73: #{tpu_custom_call.1} parent=69 // pred_region
          %s439 = sand.u32 %s77, 1
          %s440 = scalar_lea.sflag [#allocation4], %s439
          %s441 = sand.u32 %s77, 1
          %s442 = smul.addr %s441, 8
          %s443 = scalar_lea.vmem [#allocation3], %s442
          %444 = dma.done %s440, 128
        $region74: #{tpu_custom_call.1} parent=69 // pred_fallthru
          _
      $region70: #{tpu_custom_call.1} parent=5 // pred_fallthru
        _
    $region6: #{tpu_custom_call.1} parent=1 // loop_footer
      %s14 = sadd.s32 1, %s10
    $region7: #{tpu_custom_call.1} parent=1 // loop_footer_branch
      %9 = sbr.rel target = $region3
    $region8: #{tpu_custom_call.1} parent=1 // loop_exit
      _
    %445 = vsyncpa [#allocation4], 1
    %s446 = scalar_lea.sflag [#allocation4], 1
    %447 = vsyncpa %s446, 1

</llo_original>
